<compile_context>
chip_gen: v7x
topology: tpu7x:2x2x1
jax: 0.10.0
libtpu: 0.0.40
codegen_flags: <defaults>
</compile_context>

<pallas_src>
import jax
import jax.numpy as jnp
from jax.experimental import pallas as pl
from jax.experimental.pallas import tpu as pltpu


def _encoder_kernel(p_ids_ref, p_len_ref, h_ids_ref, h_len_ref,
                    emb_ref, w1_ref, b1_ref, w2_ref, b2_ref,
                    out_ref, comb_ref):
    TB, L = p_ids_ref.shape
    Vp, E = emb_ref.shape
    M = 2 * TB

    # Fuse premise + hypothesis into one stacked batch (sublane concat is
    # cheap; slicing back at a multiple of 8 is free).
    ids = jnp.concatenate([p_ids_ref[...], h_ids_ref[...]], axis=0)      # [M,L] i32
    lens = jnp.concatenate([p_len_ref[...], h_len_ref[...]], axis=0)     # [M,1] i32

    pos = jax.lax.broadcasted_iota(jnp.int32, (M, L), 1)                 # [M,L]
    valid = pos < lens                                                   # [M,L] bool
    # Fold the length mask into the token ids: invalid slots -> -1, which
    # never matches any vocab row, so the counts below are already masked.
    ids_m = jnp.where(valid, ids, -1)                                    # [M,L] i32

    # Exact per-vocab-row token counts, built as L cheap 2-D passes over
    # [M,Vp] (no [M,L,Vp] temporaries, no cross-lane relayout of ids).
    voc = jax.lax.broadcasted_iota(jnp.int32, (M, Vp), 1)                # [M,Vp]
    pool = jnp.zeros((M, Vp), jnp.float32)
    for l in range(L):  # static unroll; L is small
        pool = pool + (voc == ids_m[:, l:l + 1]).astype(jnp.float32)

    # Fused gather + sum as a single MXU matmul (bf16 operands are exact
    # integer counts, f32 accumulation); 1/len applied AFTER the dot.
    uv = jnp.dot(pool.astype(jnp.bfloat16), emb_ref[...],
                 preferred_element_type=jnp.float32)                     # [M,E] f32
    inv_len = pl.reciprocal(jnp.maximum(lens, 1).astype(jnp.float32),
                            approx=True)                                 # [M,1]
    uv = uv * inv_len
    u = uv[:TB]                                                          # [TB,E]
    v = uv[TB:]                                                          # [TB,E]

    # combined = [u, v, |u-v|, u*v] via static lane-offset stores into a bf16
    # scratch (4E = 128 -> lane-dense block feeding a single K=128 dot).
    comb_ref[:, 0 * E:1 * E] = u.astype(jnp.bfloat16)
    comb_ref[:, 1 * E:2 * E] = v.astype(jnp.bfloat16)
    comb_ref[:, 2 * E:3 * E] = jnp.abs(u - v).astype(jnp.bfloat16)
    comb_ref[:, 3 * E:4 * E] = (u * v).astype(jnp.bfloat16)

    hid = jnp.tanh(
        jnp.dot(comb_ref[...], w1_ref[...], preferred_element_type=jnp.float32)
        + b1_ref[...])                                                   # [TB,512] f32
    out = (jnp.dot(hid.astype(jnp.bfloat16), w2_ref[...],
                   preferred_element_type=jnp.float32)
           + b2_ref[...])                                                # [TB,Cp] f32
    out_ref[...] = out.astype(out_ref.dtype)


def encoder_forward(p_ids, p_len, h_ids, h_len, params, *, tb=256):
    """Forward pass of Encoder(mean, mlp).

    tb = max batch tile (multiple of 8). 256 is a good default across
    generations; it can be raised toward 512 on v6e.
    Token ids are assumed to lie in [0, V); out-of-range ids would be silently
    dropped by the counting gather (unlike jnp.take's clamping).
    """
    emb = params["emb"]
    w1, b1, w2, b2 = params["w1"], params["b1"], params["w2"], params["b2"]
    V, E = emb.shape
    B, L = p_ids.shape
    H = w1.shape[1]
    C = w2.shape[1]

    # Pad vocab to a multiple of 128 (MXU K alignment) and classes to a full
    # 128-lane tile (lane-dense unmasked output stores).
    Vp = ((V + 127) // 128) * 128
    Cp = ((C + 127) // 128) * 128
    emb_p = jnp.pad(emb.astype(jnp.bfloat16), ((0, Vp - V), (0, 0)))
    w2_p = jnp.pad(w2.astype(jnp.bfloat16), ((0, 0), (0, Cp - C)))
    b2_p = jnp.pad(b2.reshape(1, C).astype(jnp.float32), ((0, 0), (0, Cp - C)))
    w1_b = w1.astype(jnp.bfloat16)
    b1_2d = b1.reshape(1, H).astype(jnp.float32)

    # Batch tile: multiple of 8, capped at tb.  Prefer >= 2 grid steps when
    # the batch allows it so both v7x TensorCores get work ("parallel" axis).
    TB = max(8, min((tb // 8) * 8, ((B + 7) // 8) * 8))
    if B > 8 and pl.cdiv(B, TB) < 2:
        TB = max(8, ((pl.cdiv(B, 2) + 7) // 8) * 8)
    Bp = pl.cdiv(B, TB) * TB

    def pad_ids(x):
        return jnp.pad(x.astype(jnp.int32), ((0, Bp - B), (0, 0)))

    def pad_len(x):
        x2 = x.astype(jnp.int32).reshape(B, 1)
        return jnp.pad(x2, ((0, Bp - B), (0, 0)), constant_values=1)

    p_ids_p, h_ids_p = pad_ids(p_ids), pad_ids(h_ids)
    p_len_p, h_len_p = pad_len(p_len), pad_len(h_len)

    batch_block = lambda i: (i, 0)
    const_block = lambda i: (0, 0)

    # TODO(synk): the constant-index weight inputs could be single-buffered
    # (pipeline_mode=pl.Buffered(1)) to halve their resident VMEM on v7x; at
    # these weight sizes (<0.5 MiB total) it is immaterial, so the default
    # double-buffering is kept for maximum compatibility.
    out = pl.pallas_call(
        _encoder_kernel,
        out_shape=jax.ShapeDtypeStruct((Bp, Cp), jnp.float32),
        grid=(Bp // TB,),
        in_specs=[
            pl.BlockSpec((TB, L), batch_block),      # p ids
            pl.BlockSpec((TB, 1), batch_block),      # p lengths
            pl.BlockSpec((TB, L), batch_block),      # h ids
            pl.BlockSpec((TB, 1), batch_block),      # h lengths
            pl.BlockSpec((Vp, E), const_block),      # embedding table (bf16)
            pl.BlockSpec((4 * E, H), const_block),   # w1 (bf16)
            pl.BlockSpec((1, H), const_block),       # b1 (f32)
            pl.BlockSpec((H, Cp), const_block),      # w2 padded to 128 lanes (bf16)
            pl.BlockSpec((1, Cp), const_block),      # b2 padded to 128 lanes (f32)
        ],
        out_specs=pl.BlockSpec((TB, Cp), batch_block),
        scratch_shapes=[pltpu.VMEM((TB, 4 * E), jnp.bfloat16)],
        compiler_params=pltpu.CompilerParams(
            dimension_semantics=("parallel",),
            vmem_limit_bytes=32 * 1024 * 1024),      # headroom for larger TB / vocab
    )(p_ids_p, p_len_p, h_ids_p, h_len_p, emb_p, w1_b, b1_2d, w2_p, b2_p)
    return out[:B, :C]


def _reference(p_ids, p_len, h_ids, h_len, params):
    emb = params["emb"]

    def enc(ids, lens):
        e = jnp.take(emb, ids, axis=0)                               # [B, L, E]
        mask = (jnp.arange(e.shape[1])[None, :] < lens[:, None]).astype(e.dtype)
        s = jnp.sum(e * mask[:, :, None], axis=1)
        return s / lens[:, None].astype(e.dtype)

    u = enc(p_ids, p_len)
    v = enc(h_ids, h_len)
    c = jnp.concatenate([u, v, jnp.abs(u - v), u * v], axis=1)
    h = jnp.tanh(c @ params["w1"] + params["b1"])
    return h @ params["w2"] + params["b2"]


if __name__ == "__main__":
    B, L, E = 8, 16, 32       # batch, seq len, embedding_size
    V = 100                   # vocab size
    HID, C = 512, 3           # MLP hidden size, num classes

    key = jax.random.PRNGKey(0)
    k_emb, k_p, k_h, k_pl, k_hl, k_w1, k_b1, k_w2, k_b2 = jax.random.split(key, 9)

    params = {
        "emb": jax.random.normal(k_emb, (V, E), jnp.float32) * 0.1,
        "w1": jax.random.normal(k_w1, (4 * E, HID), jnp.float32) * 0.05,
        "b1": jax.random.normal(k_b1, (HID,), jnp.float32) * 0.01,
        "w2": jax.random.normal(k_w2, (HID, C), jnp.float32) * 0.05,
        "b2": jax.random.normal(k_b2, (C,), jnp.float32) * 0.01,
    }

    p_ids = jax.random.randint(k_p, (B, L), 0, V, jnp.int32)
    h_ids = jax.random.randint(k_h, (B, L), 0, V, jnp.int32)
    p_len = jax.random.randint(k_pl, (B,), 1, L + 1, jnp.int32)
    h_len = jax.random.randint(k_hl, (B,), 1, L + 1, jnp.int32)

    out = encoder_forward(p_ids, p_len, h_ids, h_len, params)
    out = jax.block_until_ready(out)

    ref = _reference(p_ids, p_len, h_ids, h_len, params)
    assert out.shape == (B, C)
    # bf16 matmul operands (emb/w1/w2) => compare with a bf16-level tolerance.
    assert jnp.allclose(out, ref, atol=2e-2, rtol=2e-2), "mismatch vs JAX reference"

    # TODO(synk): lstm/bilstm/poolbilstm encoder variants not implemented; this
    # covers the 'mean' sentence encoder + 'mlp' classifier path.
    # TODO(synk): for vocabularies too large to keep the table VMEM-resident
    # (note v7x has 64 MiB/TC vs 128 MiB on v5e/v6e), replace the counting MXU
    # gather with scalar-prefetched row DMAs from an HBM-resident (pl.ANY)
    # embedding table.
    print("KERNEL_OK")
</pallas_src>

<mosaic_0001>
module attributes {stable_mosaic.version = 11 : i64} {
  func.func @_encoder_kernel(%arg0: i32, %arg1: memref<8x16xi32, #tpu.memory_space<vmem>>, %arg2: memref<8x1xi32, #tpu.memory_space<vmem>>, %arg3: memref<8x16xi32, #tpu.memory_space<vmem>>, %arg4: memref<8x1xi32, #tpu.memory_space<vmem>>, %arg5: memref<128x32xbf16, #tpu.memory_space<vmem>>, %arg6: memref<128x512xbf16, #tpu.memory_space<vmem>>, %arg7: memref<1x512xf32, #tpu.memory_space<vmem>>, %arg8: memref<512x128xbf16, #tpu.memory_space<vmem>>, %arg9: memref<1x128xf32, #tpu.memory_space<vmem>>, %arg10: memref<8x128xf32, #tpu.memory_space<vmem>>, %arg11: memref<8x128xbf16, #tpu.memory_space<vmem>>) attributes {dimension_semantics = [#tpu.dimension_semantics<parallel>], iteration_bounds = array<i64: 1>, scalar_prefetch = 0 : i64, scratch_operands = 1 : i64, tpu.core_type = #tpu.core_type<tc>, window_params = [{transform_indices = @transform_0, window_bounds = array<i64: 8, 16>}, {transform_indices = @transform_1, window_bounds = array<i64: 8, 1>}, {transform_indices = @transform_2, window_bounds = array<i64: 8, 16>}, {transform_indices = @transform_3, window_bounds = array<i64: 8, 1>}, {pipeline_mode = #tpu.pipeline_mode<synchronous>, transform_indices = @transform_4, window_bounds = array<i64: 128, 32>}, {pipeline_mode = #tpu.pipeline_mode<synchronous>, transform_indices = @transform_5, window_bounds = array<i64: 128, 512>}, {pipeline_mode = #tpu.pipeline_mode<synchronous>, transform_indices = @transform_6, window_bounds = array<i64: 1, 512>}, {pipeline_mode = #tpu.pipeline_mode<synchronous>, transform_indices = @transform_7, window_bounds = array<i64: 512, 128>}, {pipeline_mode = #tpu.pipeline_mode<synchronous>, transform_indices = @transform_8, window_bounds = array<i64: 1, 128>}, {transform_indices = @transform_9, window_bounds = array<i64: 8, 128>}]} {
    %c0 = arith.constant 0 : index
    %c0_0 = arith.constant 0 : index
    %0 = vector.load %arg1[%c0, %c0_0] : memref<8x16xi32, #tpu.memory_space<vmem>>, vector<8x16xi32>
    %c0_1 = arith.constant 0 : index
    %c0_2 = arith.constant 0 : index
    %1 = vector.load %arg3[%c0_1, %c0_2] : memref<8x16xi32, #tpu.memory_space<vmem>>, vector<8x16xi32>
    %2 = tpu.concatenate %0, %1 in 0 : vector<8x16xi32>, vector<8x16xi32> -> vector<16x16xi32>
    %c0_3 = arith.constant 0 : index
    %c0_4 = arith.constant 0 : index
    %3 = vector.load %arg2[%c0_3, %c0_4] : memref<8x1xi32, #tpu.memory_space<vmem>>, vector<8x1xi32>
    %c0_5 = arith.constant 0 : index
    %c0_6 = arith.constant 0 : index
    %4 = vector.load %arg4[%c0_5, %c0_6] : memref<8x1xi32, #tpu.memory_space<vmem>>, vector<8x1xi32>
    %5 = tpu.concatenate %3, %4 in 0 : vector<8x1xi32>, vector<8x1xi32> -> vector<16x1xi32>
    %6 = tpu.iota {dimensions = array<i32: 1>} : vector<16x16xi32>
    %7 = vector.broadcast %5 : vector<16x1xi32> to vector<16x16xi32>
    %8 = arith.cmpi slt, %6, %7 : vector<16x16xi32>
    %c-1_i32 = arith.constant -1 : i32
    %9 = vector.broadcast %c-1_i32 : i32 to vector<16x16xi32>
    %10 = arith.select %8, %2, %9 : vector<16x16xi1>, vector<16x16xi32>
    %11 = tpu.iota {dimensions = array<i32: 1>} : vector<16x128xi32>
    %cst = arith.constant 0.000000e+00 : f32
    %12 = vector.broadcast %cst : f32 to vector<16x128xf32>
    %13 = vector.extract_strided_slice %10 {offsets = [0, 0], sizes = [16, 1], strides = [1, 1]} : vector<16x16xi32> to vector<16x1xi32>
    %14 = vector.broadcast %13 : vector<16x1xi32> to vector<16x128xi32>
    %15 = arith.cmpi eq, %11, %14 : vector<16x128xi32>
    %16 = arith.extui %15 : vector<16x128xi1> to vector<16x128xi32>
    %17 = arith.sitofp %16 : vector<16x128xi32> to vector<16x128xf32>
    %18 = arith.addf %12, %17 : vector<16x128xf32>
    %19 = vector.extract_strided_slice %10 {offsets = [0, 1], sizes = [16, 1], strides = [1, 1]} : vector<16x16xi32> to vector<16x1xi32>
    %20 = vector.broadcast %19 : vector<16x1xi32> to vector<16x128xi32>
    %21 = arith.cmpi eq, %11, %20 : vector<16x128xi32>
    %22 = arith.extui %21 : vector<16x128xi1> to vector<16x128xi32>
    %23 = arith.sitofp %22 : vector<16x128xi32> to vector<16x128xf32>
    %24 = arith.addf %18, %23 : vector<16x128xf32>
    %25 = vector.extract_strided_slice %10 {offsets = [0, 2], sizes = [16, 1], strides = [1, 1]} : vector<16x16xi32> to vector<16x1xi32>
    %26 = vector.broadcast %25 : vector<16x1xi32> to vector<16x128xi32>
    %27 = arith.cmpi eq, %11, %26 : vector<16x128xi32>
    %28 = arith.extui %27 : vector<16x128xi1> to vector<16x128xi32>
    %29 = arith.sitofp %28 : vector<16x128xi32> to vector<16x128xf32>
    %30 = arith.addf %24, %29 : vector<16x128xf32>
    %31 = vector.extract_strided_slice %10 {offsets = [0, 3], sizes = [16, 1], strides = [1, 1]} : vector<16x16xi32> to vector<16x1xi32>
    %32 = vector.broadcast %31 : vector<16x1xi32> to vector<16x128xi32>
    %33 = arith.cmpi eq, %11, %32 : vector<16x128xi32>
    %34 = arith.extui %33 : vector<16x128xi1> to vector<16x128xi32>
    %35 = arith.sitofp %34 : vector<16x128xi32> to vector<16x128xf32>
    %36 = arith.addf %30, %35 : vector<16x128xf32>
    %37 = vector.extract_strided_slice %10 {offsets = [0, 4], sizes = [16, 1], strides = [1, 1]} : vector<16x16xi32> to vector<16x1xi32>
    %38 = vector.broadcast %37 : vector<16x1xi32> to vector<16x128xi32>
    %39 = arith.cmpi eq, %11, %38 : vector<16x128xi32>
    %40 = arith.extui %39 : vector<16x128xi1> to vector<16x128xi32>
    %41 = arith.sitofp %40 : vector<16x128xi32> to vector<16x128xf32>
    %42 = arith.addf %36, %41 : vector<16x128xf32>
    %43 = vector.extract_strided_slice %10 {offsets = [0, 5], sizes = [16, 1], strides = [1, 1]} : vector<16x16xi32> to vector<16x1xi32>
    %44 = vector.broadcast %43 : vector<16x1xi32> to vector<16x128xi32>
    %45 = arith.cmpi eq, %11, %44 : vector<16x128xi32>
    %46 = arith.extui %45 : vector<16x128xi1> to vector<16x128xi32>
    %47 = arith.sitofp %46 : vector<16x128xi32> to vector<16x128xf32>
    %48 = arith.addf %42, %47 : vector<16x128xf32>
    %49 = vector.extract_strided_slice %10 {offsets = [0, 6], sizes = [16, 1], strides = [1, 1]} : vector<16x16xi32> to vector<16x1xi32>
    %50 = vector.broadcast %49 : vector<16x1xi32> to vector<16x128xi32>
    %51 = arith.cmpi eq, %11, %50 : vector<16x128xi32>
    %52 = arith.extui %51 : vector<16x128xi1> to vector<16x128xi32>
    %53 = arith.sitofp %52 : vector<16x128xi32> to vector<16x128xf32>
    %54 = arith.addf %48, %53 : vector<16x128xf32>
    %55 = vector.extract_strided_slice %10 {offsets = [0, 7], sizes = [16, 1], strides = [1, 1]} : vector<16x16xi32> to vector<16x1xi32>
    %56 = vector.broadcast %55 : vector<16x1xi32> to vector<16x128xi32>
    %57 = arith.cmpi eq, %11, %56 : vector<16x128xi32>
    %58 = arith.extui %57 : vector<16x128xi1> to vector<16x128xi32>
    %59 = arith.sitofp %58 : vector<16x128xi32> to vector<16x128xf32>
    %60 = arith.addf %54, %59 : vector<16x128xf32>
    %61 = vector.extract_strided_slice %10 {offsets = [0, 8], sizes = [16, 1], strides = [1, 1]} : vector<16x16xi32> to vector<16x1xi32>
    %62 = vector.broadcast %61 : vector<16x1xi32> to vector<16x128xi32>
    %63 = arith.cmpi eq, %11, %62 : vector<16x128xi32>
    %64 = arith.extui %63 : vector<16x128xi1> to vector<16x128xi32>
    %65 = arith.sitofp %64 : vector<16x128xi32> to vector<16x128xf32>
    %66 = arith.addf %60, %65 : vector<16x128xf32>
    %67 = vector.extract_strided_slice %10 {offsets = [0, 9], sizes = [16, 1], strides = [1, 1]} : vector<16x16xi32> to vector<16x1xi32>
    %68 = vector.broadcast %67 : vector<16x1xi32> to vector<16x128xi32>
    %69 = arith.cmpi eq, %11, %68 : vector<16x128xi32>
    %70 = arith.extui %69 : vector<16x128xi1> to vector<16x128xi32>
    %71 = arith.sitofp %70 : vector<16x128xi32> to vector<16x128xf32>
    %72 = arith.addf %66, %71 : vector<16x128xf32>
    %73 = vector.extract_strided_slice %10 {offsets = [0, 10], sizes = [16, 1], strides = [1, 1]} : vector<16x16xi32> to vector<16x1xi32>
    %74 = vector.broadcast %73 : vector<16x1xi32> to vector<16x128xi32>
    %75 = arith.cmpi eq, %11, %74 : vector<16x128xi32>
    %76 = arith.extui %75 : vector<16x128xi1> to vector<16x128xi32>
    %77 = arith.sitofp %76 : vector<16x128xi32> to vector<16x128xf32>
    %78 = arith.addf %72, %77 : vector<16x128xf32>
    %79 = vector.extract_strided_slice %10 {offsets = [0, 11], sizes = [16, 1], strides = [1, 1]} : vector<16x16xi32> to vector<16x1xi32>
    %80 = vector.broadcast %79 : vector<16x1xi32> to vector<16x128xi32>
    %81 = arith.cmpi eq, %11, %80 : vector<16x128xi32>
    %82 = arith.extui %81 : vector<16x128xi1> to vector<16x128xi32>
    %83 = arith.sitofp %82 : vector<16x128xi32> to vector<16x128xf32>
    %84 = arith.addf %78, %83 : vector<16x128xf32>
    %85 = vector.extract_strided_slice %10 {offsets = [0, 12], sizes = [16, 1], strides = [1, 1]} : vector<16x16xi32> to vector<16x1xi32>
    %86 = vector.broadcast %85 : vector<16x1xi32> to vector<16x128xi32>
    %87 = arith.cmpi eq, %11, %86 : vector<16x128xi32>
    %88 = arith.extui %87 : vector<16x128xi1> to vector<16x128xi32>
    %89 = arith.sitofp %88 : vector<16x128xi32> to vector<16x128xf32>
    %90 = arith.addf %84, %89 : vector<16x128xf32>
    %91 = vector.extract_strided_slice %10 {offsets = [0, 13], sizes = [16, 1], strides = [1, 1]} : vector<16x16xi32> to vector<16x1xi32>
    %92 = vector.broadcast %91 : vector<16x1xi32> to vector<16x128xi32>
    %93 = arith.cmpi eq, %11, %92 : vector<16x128xi32>
    %94 = arith.extui %93 : vector<16x128xi1> to vector<16x128xi32>
    %95 = arith.sitofp %94 : vector<16x128xi32> to vector<16x128xf32>
    %96 = arith.addf %90, %95 : vector<16x128xf32>
    %97 = vector.extract_strided_slice %10 {offsets = [0, 14], sizes = [16, 1], strides = [1, 1]} : vector<16x16xi32> to vector<16x1xi32>
    %98 = vector.broadcast %97 : vector<16x1xi32> to vector<16x128xi32>
    %99 = arith.cmpi eq, %11, %98 : vector<16x128xi32>
    %100 = arith.extui %99 : vector<16x128xi1> to vector<16x128xi32>
    %101 = arith.sitofp %100 : vector<16x128xi32> to vector<16x128xf32>
    %102 = arith.addf %96, %101 : vector<16x128xf32>
    %103 = vector.extract_strided_slice %10 {offsets = [0, 15], sizes = [16, 1], strides = [1, 1]} : vector<16x16xi32> to vector<16x1xi32>
    %104 = vector.broadcast %103 : vector<16x1xi32> to vector<16x128xi32>
    %105 = arith.cmpi eq, %11, %104 : vector<16x128xi32>
    %106 = arith.extui %105 : vector<16x128xi1> to vector<16x128xi32>
    %107 = arith.sitofp %106 : vector<16x128xi32> to vector<16x128xf32>
    %108 = arith.addf %102, %107 : vector<16x128xf32>
    %109 = arith.truncf %108 : vector<16x128xf32> to vector<16x128xbf16>
    %c0_7 = arith.constant 0 : index
    %c0_8 = arith.constant 0 : index
    %110 = vector.load %arg5[%c0_7, %c0_8] : memref<128x32xbf16, #tpu.memory_space<vmem>>, vector<128x32xbf16>
    %cst_9 = arith.constant dense<0.000000e+00> : vector<16x32xf32>
    %111 = tpu.matmul %109, %110, %cst_9 {dimension_numbers = #tpu.dot_dimension_numbers<[1], [0], [0], [1], [0, 0, 1, 1], [], []>} : vector<16x128xbf16>, vector<128x32xbf16>, vector<16x32xf32> -> vector<16x32xf32>
    %c1_i32 = arith.constant 1 : i32
    %112 = vector.broadcast %c1_i32 : i32 to vector<16x1xi32>
    %113 = arith.maxsi %5, %112 : vector<16x1xi32>
    %114 = arith.sitofp %113 : vector<16x1xi32> to vector<16x1xf32>
    %115 = tpu.reciprocal %114 {approx = true} : vector<16x1xf32> -> vector<16x1xf32>
    %116 = vector.broadcast %115 : vector<16x1xf32> to vector<16x32xf32>
    %117 = arith.mulf %111, %116 : vector<16x32xf32>
    %118 = vector.extract_strided_slice %117 {offsets = [0, 0], sizes = [8, 32], strides = [1, 1]} : vector<16x32xf32> to vector<8x32xf32>
    %119 = vector.extract_strided_slice %117 {offsets = [8, 0], sizes = [8, 32], strides = [1, 1]} : vector<16x32xf32> to vector<8x32xf32>
    %120 = arith.truncf %118 : vector<8x32xf32> to vector<8x32xbf16>
    %c0_10 = arith.constant 0 : index
    %c0_11 = arith.constant 0 : index
    %121 = vector.load %arg11[%c0_10, %c0_11] : memref<8x128xbf16, #tpu.memory_space<vmem>>, vector<8x32xbf16>
    tpu.vector_store %arg11[%c0_10, %c0_11], %120 {strides = array<i32>} : memref<8x128xbf16, #tpu.memory_space<vmem>>, vector<8x32xbf16>,
    %122 = arith.truncf %119 : vector<8x32xf32> to vector<8x32xbf16>
    %c0_12 = arith.constant 0 : index
    %c32 = arith.constant 32 : index
    %123 = vector.load %arg11[%c0_12, %c32] : memref<8x128xbf16, #tpu.memory_space<vmem>>, vector<8x32xbf16>
    tpu.vector_store %arg11[%c0_12, %c32], %122 {strides = array<i32>} : memref<8x128xbf16, #tpu.memory_space<vmem>>, vector<8x32xbf16>,
    %124 = arith.subf %118, %119 : vector<8x32xf32>
    %125 = math.absf %124 : vector<8x32xf32>
    %126 = arith.truncf %125 : vector<8x32xf32> to vector<8x32xbf16>
    %c0_13 = arith.constant 0 : index
    %c64 = arith.constant 64 : index
    %127 = vector.load %arg11[%c0_13, %c64] : memref<8x128xbf16, #tpu.memory_space<vmem>>, vector<8x32xbf16>
    tpu.vector_store %arg11[%c0_13, %c64], %126 {strides = array<i32>} : memref<8x128xbf16, #tpu.memory_space<vmem>>, vector<8x32xbf16>,
    %128 = arith.mulf %118, %119 : vector<8x32xf32>
    %129 = arith.truncf %128 : vector<8x32xf32> to vector<8x32xbf16>
    %c0_14 = arith.constant 0 : index
    %c96 = arith.constant 96 : index
    %130 = vector.load %arg11[%c0_14, %c96] : memref<8x128xbf16, #tpu.memory_space<vmem>>, vector<8x32xbf16>
    tpu.vector_store %arg11[%c0_14, %c96], %129 {strides = array<i32>} : memref<8x128xbf16, #tpu.memory_space<vmem>>, vector<8x32xbf16>,
    %c0_15 = arith.constant 0 : index
    %c0_16 = arith.constant 0 : index
    %131 = vector.load %arg11[%c0_15, %c0_16] : memref<8x128xbf16, #tpu.memory_space<vmem>>, vector<8x128xbf16>
    %c0_17 = arith.constant 0 : index
    %c0_18 = arith.constant 0 : index
    %132 = vector.load %arg6[%c0_17, %c0_18] : memref<128x512xbf16, #tpu.memory_space<vmem>>, vector<128x512xbf16>
    %cst_19 = arith.constant dense<0.000000e+00> : vector<8x512xf32>
    %133 = tpu.matmul %131, %132, %cst_19 {dimension_numbers = #tpu.dot_dimension_numbers<[1], [0], [0], [1], [0, 0, 1, 1], [], []>} : vector<8x128xbf16>, vector<128x512xbf16>, vector<8x512xf32> -> vector<8x512xf32>
    %c0_20 = arith.constant 0 : index
    %c0_21 = arith.constant 0 : index
    %134 = vector.load %arg7[%c0_20, %c0_21] : memref<1x512xf32, #tpu.memory_space<vmem>>, vector<1x512xf32>
    %135 = vector.broadcast %134 : vector<1x512xf32> to vector<8x512xf32>
    %136 = arith.addf %133, %135 : vector<8x512xf32>
    %137 = math.tanh %136 : vector<8x512xf32>
    %138 = arith.truncf %137 : vector<8x512xf32> to vector<8x512xbf16>
    %c0_22 = arith.constant 0 : index
    %c0_23 = arith.constant 0 : index
    %139 = vector.load %arg8[%c0_22, %c0_23] : memref<512x128xbf16, #tpu.memory_space<vmem>>, vector<512x128xbf16>
    %cst_24 = arith.constant dense<0.000000e+00> : vector<8x128xf32>
    %140 = tpu.matmul %138, %139, %cst_24 {dimension_numbers = #tpu.dot_dimension_numbers<[1], [0], [0], [1], [0, 0, 1, 1], [], []>} : vector<8x512xbf16>, vector<512x128xbf16>, vector<8x128xf32> -> vector<8x128xf32>
    %c0_25 = arith.constant 0 : index
    %c0_26 = arith.constant 0 : index
    %141 = vector.load %arg9[%c0_25, %c0_26] : memref<1x128xf32, #tpu.memory_space<vmem>>, vector<1x128xf32>
    %142 = vector.broadcast %141 : vector<1x128xf32> to vector<8x128xf32>
    %143 = arith.addf %140, %142 : vector<8x128xf32>
    %c0_27 = arith.constant 0 : index
    %c0_28 = arith.constant 0 : index
    %144 = vector.load %arg10[%c0_27, %c0_28] : memref<8x128xf32, #tpu.memory_space<vmem>>, vector<8x128xf32>
    tpu.vector_store %arg10[%c0_27, %c0_28], %143 {strides = array<i32>} : memref<8x128xf32, #tpu.memory_space<vmem>>, vector<8x128xf32>,
    return
  }
  func.func @transform_0(%arg0: i32) -> (i32, i32) {
    %c0_i32 = arith.constant 0 : i32
    %c0_i32_0 = arith.constant 0 : i32
    return %arg0, %c0_i32 : i32, i32
  }
  func.func @transform_1(%arg0: i32) -> (i32, i32) {
    %c0_i32 = arith.constant 0 : i32
    %c0_i32_0 = arith.constant 0 : i32
    return %arg0, %c0_i32 : i32, i32
  }
  func.func @transform_2(%arg0: i32) -> (i32, i32) {
    %c0_i32 = arith.constant 0 : i32
    %c0_i32_0 = arith.constant 0 : i32
    return %arg0, %c0_i32 : i32, i32
  }
  func.func @transform_3(%arg0: i32) -> (i32, i32) {
    %c0_i32 = arith.constant 0 : i32
    %c0_i32_0 = arith.constant 0 : i32
    return %arg0, %c0_i32 : i32, i32
  }
  func.func @transform_4(%arg0: i32) -> (i32, i32) {
    %c0_i32 = arith.constant 0 : i32
    %c0_i32_0 = arith.constant 0 : i32
    %c0_i32_1 = arith.constant 0 : i32
    return %c0_i32, %c0_i32_0 : i32, i32
  }
  func.func @transform_5(%arg0: i32) -> (i32, i32) {
    %c0_i32 = arith.constant 0 : i32
    %c0_i32_0 = arith.constant 0 : i32
    %c0_i32_1 = arith.constant 0 : i32
    return %c0_i32, %c0_i32_0 : i32, i32
  }
  func.func @transform_6(%arg0: i32) -> (i32, i32) {
    %c0_i32 = arith.constant 0 : i32
    %c0_i32_0 = arith.constant 0 : i32
    %c0_i32_1 = arith.constant 0 : i32
    return %c0_i32, %c0_i32_0 : i32, i32
  }
  func.func @transform_7(%arg0: i32) -> (i32, i32) {
    %c0_i32 = arith.constant 0 : i32
    %c0_i32_0 = arith.constant 0 : i32
    %c0_i32_1 = arith.constant 0 : i32
    return %c0_i32, %c0_i32_0 : i32, i32
  }
  func.func @transform_8(%arg0: i32) -> (i32, i32) {
    %c0_i32 = arith.constant 0 : i32
    %c0_i32_0 = arith.constant 0 : i32
    %c0_i32_1 = arith.constant 0 : i32
    return %c0_i32, %c0_i32_0 : i32, i32
  }
  func.func @transform_9(%arg0: i32) -> (i32, i32) {
    %c0_i32 = arith.constant 0 : i32
    %c0_i32_0 = arith.constant 0 : i32
    return %arg0, %c0_i32 : i32, i32
  }
}

</mosaic_0001>

<llo_original>
// kernel: tpu_custom_call.1
$region0: #{tpu_custom_call.1}
  #allocation0 [shape = 'u32[]', space=smem, size = 0x4, offset = 0x4, fixed_abs, tag = 'smem constant byte address 0x4 - core index']
  #allocation1 [shape = 'u32[144,128]{1,0:T(1,128)}', space=vmem, size = 0x12000, scoped, tag = 'internal scratch']
  #allocation2 [shape = 'bf16[8,128]{1,0:T(8,128)(2,1)}', space=vmem, size = 0x800, scoped, tag = 'scratch operand']
  %s0 = inlined_call_operand.vmem [shape: s32[8,16], index: 0, kind: input, shape index: {}]
  %s1 = inlined_call_operand.vmem [shape: s32[8,1], index: 1, kind: input, shape index: {}]
  %s2 = inlined_call_operand.vmem [shape: s32[8,16], index: 2, kind: input, shape index: {}]
  %s3 = inlined_call_operand.vmem [shape: s32[8,1], index: 3, kind: input, shape index: {}]
  %s4 = inlined_call_operand.vmem [shape: bf16[128,32], index: 4, kind: input, shape index: {}]
  %s5 = inlined_call_operand.hbm [shape: bf16[128,512], index: 5, kind: input, shape index: {}]
  %s6 = inlined_call_operand.vmem [shape: f32[1,512], index: 6, kind: input, shape index: {}]
  %s7 = inlined_call_operand.hbm [shape: bf16[512,128], index: 7, kind: input, shape index: {}]
  %s8 = inlined_call_operand.vmem [shape: f32[1,128], index: 8, kind: input, shape index: {}]
  %s9 = inlined_call_operand.hbm [shape: f32[8,128], index: 9, kind: output, shape index: {}]
  %s10 = sld [smem:[#allocation0]]
  $region54: #{tpu_custom_call.1} parent=0
    _
  %s12 = ssub.s32 1, %s10
  %s13 = scalar_select 0, %s12, %s10
  $region1: #{tpu_custom_call.1} parent=0
    #allocation3 [shape = 'u8[131072]{0}', space=vmem, size = 0x20000, scoped, tag = 'input window, operand 5, single buffered']
    #allocation4 [shape = 's32[1]{0}', space=sflag, size = 0x4, scoped, tag = 'scoped memory for tpu_custom_call.1']
    #allocation5 [shape = 's32[1]{0}', space=sflag, size = 0x4, scoped, tag = 'scoped memory for tpu_custom_call.1']
    #allocation6 [shape = 'u8[131072]{0}', space=vmem, size = 0x20000, scoped, tag = 'input window, operand 7, single buffered']
    #allocation7 [shape = 's32[1]{0}', space=sflag, size = 0x4, scoped, tag = 'scoped memory for tpu_custom_call.1']
    #allocation8 [shape = 'u8[4096]{0}', space=vmem, size = 0x1000, scoped, tag = 'output window, operand 0, single buffered']
    %14 = vsyncpa [#allocation4], 0
    %15 = vsyncpa [#allocation7], 0
    %16 = vsyncpa [#allocation5], 0
    // Predicated region
    $region2: #{tpu_custom_call.1} parent=1 // pred_check
      _
    $region3: #{tpu_custom_call.1} parent=1 // pred_check_branch
      %18 = sbr.rel (0) target = $region5
    $region4: #{tpu_custom_call.1} parent=1 // pred_region
      _
    $region5: #{tpu_custom_call.1} parent=1 // pred_fallthru
      _
    // Predicated region
    $region6: #{tpu_custom_call.1} parent=1 // pred_check
      _
    $region7: #{tpu_custom_call.1} parent=1 // pred_check_branch
      %20 = sbr.rel (0) target = $region9
    $region8: #{tpu_custom_call.1} parent=1 // pred_region
      _
    $region9: #{tpu_custom_call.1} parent=1 // pred_fallthru
      _
    // Predicated region
    $region10: #{tpu_custom_call.1} parent=1 // pred_check
      _
    $region11: #{tpu_custom_call.1} parent=1 // pred_check_branch
      %22 = sbr.rel (0) target = $region13
    $region12: #{tpu_custom_call.1} parent=1 // pred_region
      _
    $region13: #{tpu_custom_call.1} parent=1 // pred_fallthru
      _
    // Predicated region
    $region14: #{tpu_custom_call.1} parent=1 // pred_check
      _
    $region15: #{tpu_custom_call.1} parent=1 // pred_check_branch
      %24 = sbr.rel (0) target = $region17
    $region16: #{tpu_custom_call.1} parent=1 // pred_region
      _
    $region17: #{tpu_custom_call.1} parent=1 // pred_fallthru
      _
    // Predicated region
    $region18: #{tpu_custom_call.1} parent=1 // pred_check
      _
    $region19: #{tpu_custom_call.1} parent=1 // pred_check_branch
      %26 = sbr.rel (0) target = $region21
    $region20: #{tpu_custom_call.1} parent=1 // pred_region
      _
    $region21: #{tpu_custom_call.1} parent=1 // pred_fallthru
      _
    // Predicated region
    $region22: #{tpu_custom_call.1} parent=1 // pred_check
      _
    $region23: #{tpu_custom_call.1} parent=1 // pred_check_branch
      %28 = sbr.rel (0) target = $region25
    $region24: #{tpu_custom_call.1} parent=1 // pred_region
      %s30 = ssub.s32 4096, 4096
      %31 = vsyncadd [#allocation4], %s30
      %s32 = sshll.u32 [#allocation3], 4
      %s33 = int_to_ptr.vmem [resolvable:$true] %s32
      %38 = dma.hbm_to_vmem [thread:$0]  %s5, 4096, %s33, [#allocation4], 256, 256, 16
    $region25: #{tpu_custom_call.1} parent=1 // pred_fallthru
      _
    // Predicated region
    $region26: #{tpu_custom_call.1} parent=1 // pred_check
      _
    $region27: #{tpu_custom_call.1} parent=1 // pred_check_branch
      %40 = sbr.rel (0) target = $region29
    $region28: #{tpu_custom_call.1} parent=1 // pred_region
      _
    $region29: #{tpu_custom_call.1} parent=1 // pred_fallthru
      _
    // Predicated region
    $region30: #{tpu_custom_call.1} parent=1 // pred_check
      _
    $region31: #{tpu_custom_call.1} parent=1 // pred_check_branch
      %42 = sbr.rel (0) target = $region33
    $region32: #{tpu_custom_call.1} parent=1 // pred_region
      %s44 = ssub.s32 4096, 4096
      %45 = vsyncadd [#allocation7], %s44
      %s46 = sshll.u32 [#allocation6], 4
      %s47 = int_to_ptr.vmem [resolvable:$true] %s46
      %52 = dma.hbm_to_vmem [thread:$0]  %s7, 4096, %s47, [#allocation7], 64, 64, 4
    $region33: #{tpu_custom_call.1} parent=1 // pred_fallthru
      _
    // Predicated region
    $region34: #{tpu_custom_call.1} parent=1 // pred_check
      _
    $region35: #{tpu_custom_call.1} parent=1 // pred_check_branch
      %54 = sbr.rel (0) target = $region37
    $region36: #{tpu_custom_call.1} parent=1 // pred_region
      _
    $region37: #{tpu_custom_call.1} parent=1 // pred_fallthru
      _
    // Predicated region
    $region38: #{tpu_custom_call.1} parent=1 // pred_check
      _
    $region39: #{tpu_custom_call.1} parent=1 // pred_check_branch
      %56 = sbr.rel (0) target = $region41
    $region40: #{tpu_custom_call.1} parent=1 // pred_region
      %57 = dma.done [#allocation4], 4096
    $region41: #{tpu_custom_call.1} parent=1 // pred_fallthru
      _
    // Predicated region
    $region42: #{tpu_custom_call.1} parent=1 // pred_check
      _
    $region43: #{tpu_custom_call.1} parent=1 // pred_check_branch
      %59 = sbr.rel (0) target = $region45
    $region44: #{tpu_custom_call.1} parent=1 // pred_region
      %60 = dma.done [#allocation7], 4096
    $region45: #{tpu_custom_call.1} parent=1 // pred_fallthru
      _
    %v62 = vld [vmem:[%s0] sm:$0xff]
    %v63 = vld [vmem:[%s2] sm:$0xff]
    %v64 = vld [vmem:[%s1] sm:$0xff]
    %v65 = vld [vmem:[%s3] sm:$0xff]
    %v66 = vlaneseq
    %v67 = vand.u32 %v66, 127
    %68 = vset.pattern.permute.xlu0 0
    %69 = vperm.xlu0 %68, %v64
    %v70 = vpop.permute.xlu0 %69
    %71 = vset.pattern.permute.xlu0 0
    %72 = vperm.xlu0 %71, %v65
    %v73 = vpop.permute.xlu0 %72
    %vm74 = vcmp.lt.s32.totalorder %v67, %v70
    %vm75 = vcmp.lt.s32.totalorder %v67, %v73
    %v76 = vsel %vm74, %v62, 4294967295
    %v77 = vsel %vm75, %v63, 4294967295
    %78 = vset.pattern.permute.xlu0 0
    %79 = vperm.xlu0 %78, %v76
    %v80 = vpop.permute.xlu0 %79
    %81 = vset.pattern.permute.xlu0 0
    %82 = vperm.xlu0 %81, %v77
    %v83 = vpop.permute.xlu0 %82
    %vm84 = vcmp.eq.s32.totalorder %v67, %v80
    %vm85 = vcmp.eq.s32.totalorder %v67, %v83
    %v86 = vsel %vm84, 1, 0
    %v87 = vsel %vm85, 1, 0
    %v88 = vcvt.s32.f32 %v86
    %v89 = vcvt.s32.f32 %v87
    %v90 = vadd.f32 %v88, 0.0
    %v91 = vadd.f32 %v89, 0.0
    %92 = vset.pattern.permute.xlu0 1
    %93 = vperm.xlu0 %92, %v76
    %v94 = vpop.permute.xlu0 %93
    %95 = vset.pattern.permute.xlu0 1
    %96 = vperm.xlu0 %95, %v77
    %v97 = vpop.permute.xlu0 %96
    %vm98 = vcmp.eq.s32.totalorder %v67, %v94
    %vm99 = vcmp.eq.s32.totalorder %v67, %v97
    %v100 = vsel %vm98, 1, 0
    %v101 = vsel %vm99, 1, 0
    %v102 = vcvt.s32.f32 %v100
    %v103 = vcvt.s32.f32 %v101
    %v104 = vadd.f32 %v90, %v102
    %v105 = vadd.f32 %v91, %v103
    %106 = vset.pattern.permute.xlu0 2
    %107 = vperm.xlu0 %106, %v76
    %v108 = vpop.permute.xlu0 %107
    %109 = vset.pattern.permute.xlu0 2
    %110 = vperm.xlu0 %109, %v77
    %v111 = vpop.permute.xlu0 %110
    %vm112 = vcmp.eq.s32.totalorder %v67, %v108
    %vm113 = vcmp.eq.s32.totalorder %v67, %v111
    %v114 = vsel %vm112, 1, 0
    %v115 = vsel %vm113, 1, 0
    %v116 = vcvt.s32.f32 %v114
    %v117 = vcvt.s32.f32 %v115
    %v118 = vadd.f32 %v104, %v116
    %v119 = vadd.f32 %v105, %v117
    %120 = vset.pattern.permute.xlu0 3
    %121 = vperm.xlu0 %120, %v76
    %v122 = vpop.permute.xlu0 %121
    %123 = vset.pattern.permute.xlu0 3
    %124 = vperm.xlu0 %123, %v77
    %v125 = vpop.permute.xlu0 %124
    %vm126 = vcmp.eq.s32.totalorder %v67, %v122
    %vm127 = vcmp.eq.s32.totalorder %v67, %v125
    %v128 = vsel %vm126, 1, 0
    %v129 = vsel %vm127, 1, 0
    %v130 = vcvt.s32.f32 %v128
    %v131 = vcvt.s32.f32 %v129
    %v132 = vadd.f32 %v118, %v130
    %v133 = vadd.f32 %v119, %v131
    %134 = vset.pattern.permute.xlu0 4
    %135 = vperm.xlu0 %134, %v76
    %v136 = vpop.permute.xlu0 %135
    %137 = vset.pattern.permute.xlu0 4
    %138 = vperm.xlu0 %137, %v77
    %v139 = vpop.permute.xlu0 %138
    %vm140 = vcmp.eq.s32.totalorder %v67, %v136
    %vm141 = vcmp.eq.s32.totalorder %v67, %v139
    %v142 = vsel %vm140, 1, 0
    %v143 = vsel %vm141, 1, 0
    %v144 = vcvt.s32.f32 %v142
    %v145 = vcvt.s32.f32 %v143
    %v146 = vadd.f32 %v132, %v144
    %v147 = vadd.f32 %v133, %v145
    %148 = vset.pattern.permute.xlu0 5
    %149 = vperm.xlu0 %148, %v76
    %v150 = vpop.permute.xlu0 %149
    %151 = vset.pattern.permute.xlu0 5
    %152 = vperm.xlu0 %151, %v77
    %v153 = vpop.permute.xlu0 %152
    %vm154 = vcmp.eq.s32.totalorder %v67, %v150
    %vm155 = vcmp.eq.s32.totalorder %v67, %v153
    %v156 = vsel %vm154, 1, 0
    %v157 = vsel %vm155, 1, 0
    %v158 = vcvt.s32.f32 %v156
    %v159 = vcvt.s32.f32 %v157
    %v160 = vadd.f32 %v146, %v158
    %v161 = vadd.f32 %v147, %v159
    %162 = vset.pattern.permute.xlu0 6
    %163 = vperm.xlu0 %162, %v76
    %v164 = vpop.permute.xlu0 %163
    %165 = vset.pattern.permute.xlu0 6
    %166 = vperm.xlu0 %165, %v77
    %v167 = vpop.permute.xlu0 %166
    %vm168 = vcmp.eq.s32.totalorder %v67, %v164
    %vm169 = vcmp.eq.s32.totalorder %v67, %v167
    %v170 = vsel %vm168, 1, 0
    %v171 = vsel %vm169, 1, 0
    %v172 = vcvt.s32.f32 %v170
    %v173 = vcvt.s32.f32 %v171
    %v174 = vadd.f32 %v160, %v172
    %v175 = vadd.f32 %v161, %v173
    %176 = vset.pattern.permute.xlu0 7
    %177 = vperm.xlu0 %176, %v76
    %v178 = vpop.permute.xlu0 %177
    %179 = vset.pattern.permute.xlu0 7
    %180 = vperm.xlu0 %179, %v77
    %v181 = vpop.permute.xlu0 %180
    %vm182 = vcmp.eq.s32.totalorder %v67, %v178
    %vm183 = vcmp.eq.s32.totalorder %v67, %v181
    %v184 = vsel %vm182, 1, 0
    %v185 = vsel %vm183, 1, 0
    %v186 = vcvt.s32.f32 %v184
    %v187 = vcvt.s32.f32 %v185
    %v188 = vadd.f32 %v174, %v186
    %v189 = vadd.f32 %v175, %v187
    %190 = vset.pattern.permute.xlu0 8
    %191 = vperm.xlu0 %190, %v76
    %v192 = vpop.permute.xlu0 %191
    %193 = vset.pattern.permute.xlu0 8
    %194 = vperm.xlu0 %193, %v77
    %v195 = vpop.permute.xlu0 %194
    %vm196 = vcmp.eq.s32.totalorder %v67, %v192
    %vm197 = vcmp.eq.s32.totalorder %v67, %v195
    %v198 = vsel %vm196, 1, 0
    %v199 = vsel %vm197, 1, 0
    %v200 = vcvt.s32.f32 %v198
    %v201 = vcvt.s32.f32 %v199
    %v202 = vadd.f32 %v188, %v200
    %v203 = vadd.f32 %v189, %v201
    %204 = vset.pattern.permute.xlu0 9
    %205 = vperm.xlu0 %204, %v76
    %v206 = vpop.permute.xlu0 %205
    %207 = vset.pattern.permute.xlu0 9
    %208 = vperm.xlu0 %207, %v77
    %v209 = vpop.permute.xlu0 %208
    %vm210 = vcmp.eq.s32.totalorder %v67, %v206
    %vm211 = vcmp.eq.s32.totalorder %v67, %v209
    %v212 = vsel %vm210, 1, 0
    %v213 = vsel %vm211, 1, 0
    %v214 = vcvt.s32.f32 %v212
    %v215 = vcvt.s32.f32 %v213
    %v216 = vadd.f32 %v202, %v214
    %v217 = vadd.f32 %v203, %v215
    %218 = vset.pattern.permute.xlu0 10
    %219 = vperm.xlu0 %218, %v76
    %v220 = vpop.permute.xlu0 %219
    %221 = vset.pattern.permute.xlu0 10
    %222 = vperm.xlu0 %221, %v77
    %v223 = vpop.permute.xlu0 %222
    %vm224 = vcmp.eq.s32.totalorder %v67, %v220
    %vm225 = vcmp.eq.s32.totalorder %v67, %v223
    %v226 = vsel %vm224, 1, 0
    %v227 = vsel %vm225, 1, 0
    %v228 = vcvt.s32.f32 %v226
    %v229 = vcvt.s32.f32 %v227
    %v230 = vadd.f32 %v216, %v228
    %v231 = vadd.f32 %v217, %v229
    %232 = vset.pattern.permute.xlu0 11
    %233 = vperm.xlu0 %232, %v76
    %v234 = vpop.permute.xlu0 %233
    %235 = vset.pattern.permute.xlu0 11
    %236 = vperm.xlu0 %235, %v77
    %v237 = vpop.permute.xlu0 %236
    %vm238 = vcmp.eq.s32.totalorder %v67, %v234
    %vm239 = vcmp.eq.s32.totalorder %v67, %v237
    %v240 = vsel %vm238, 1, 0
    %v241 = vsel %vm239, 1, 0
    %v242 = vcvt.s32.f32 %v240
    %v243 = vcvt.s32.f32 %v241
    %v244 = vadd.f32 %v230, %v242
    %v245 = vadd.f32 %v231, %v243
    %246 = vset.pattern.permute.xlu0 12
    %247 = vperm.xlu0 %246, %v76
    %v248 = vpop.permute.xlu0 %247
    %249 = vset.pattern.permute.xlu0 12
    %250 = vperm.xlu0 %249, %v77
    %v251 = vpop.permute.xlu0 %250
    %vm252 = vcmp.eq.s32.totalorder %v67, %v248
    %vm253 = vcmp.eq.s32.totalorder %v67, %v251
    %v254 = vsel %vm252, 1, 0
    %v255 = vsel %vm253, 1, 0
    %v256 = vcvt.s32.f32 %v254
    %v257 = vcvt.s32.f32 %v255
    %v258 = vadd.f32 %v244, %v256
    %v259 = vadd.f32 %v245, %v257
    %260 = vset.pattern.permute.xlu0 13
    %261 = vperm.xlu0 %260, %v76
    %v262 = vpop.permute.xlu0 %261
    %263 = vset.pattern.permute.xlu0 13
    %264 = vperm.xlu0 %263, %v77
    %v265 = vpop.permute.xlu0 %264
    %vm266 = vcmp.eq.s32.totalorder %v67, %v262
    %vm267 = vcmp.eq.s32.totalorder %v67, %v265
    %v268 = vsel %vm266, 1, 0
    %v269 = vsel %vm267, 1, 0
    %v270 = vcvt.s32.f32 %v268
    %v271 = vcvt.s32.f32 %v269
    %v272 = vadd.f32 %v258, %v270
    %v273 = vadd.f32 %v259, %v271
    %274 = vset.pattern.permute.xlu0 14
    %275 = vperm.xlu0 %274, %v76
    %v276 = vpop.permute.xlu0 %275
    %277 = vset.pattern.permute.xlu0 14
    %278 = vperm.xlu0 %277, %v77
    %v279 = vpop.permute.xlu0 %278
    %vm280 = vcmp.eq.s32.totalorder %v67, %v276
    %vm281 = vcmp.eq.s32.totalorder %v67, %v279
    %v282 = vsel %vm280, 1, 0
    %v283 = vsel %vm281, 1, 0
    %v284 = vcvt.s32.f32 %v282
    %v285 = vcvt.s32.f32 %v283
    %v286 = vadd.f32 %v272, %v284
    %v287 = vadd.f32 %v273, %v285
    %288 = vset.pattern.permute.xlu0 15
    %289 = vperm.xlu0 %288, %v76
    %v290 = vpop.permute.xlu0 %289
    %291 = vset.pattern.permute.xlu0 15
    %292 = vperm.xlu0 %291, %v77
    %v293 = vpop.permute.xlu0 %292
    %vm294 = vcmp.eq.s32.totalorder %v67, %v290
    %vm295 = vcmp.eq.s32.totalorder %v67, %v293
    %v296 = vsel %vm294, 1, 0
    %v297 = vsel %vm295, 1, 0
    %v298 = vcvt.s32.f32 %v296
    %v299 = vcvt.s32.f32 %v297
    %v300 = vadd.f32 %v286, %v298
    %v301 = vadd.f32 %v287, %v299
    %v302 = vpack.c.bf16 %v301, %v300
    %v303 = vld [vmem:[%s4] sm:$0xf]
    %v304 = vld [vmem:[%s4 + $0x4] sm:$0xf]
    %v305 = vld [vmem:[%s4 + $0x8] sm:$0xf]
    %v306 = vld [vmem:[%s4 + $0xc] sm:$0xf]
    %v307 = vld [vmem:[%s4 + $0x10] sm:$0xf]
    %v308 = vld [vmem:[%s4 + $0x14] sm:$0xf]
    %v309 = vld [vmem:[%s4 + $0x18] sm:$0xf]
    %v310 = vld [vmem:[%s4 + $0x1c] sm:$0xf]
    %v311 = vld [vmem:[%s4 + $0x20] sm:$0xf]
    %v312 = vld [vmem:[%s4 + $0x24] sm:$0xf]
    %v313 = vld [vmem:[%s4 + $0x28] sm:$0xf]
    %v314 = vld [vmem:[%s4 + $0x2c] sm:$0xf]
    %v315 = vld [vmem:[%s4 + $0x30] sm:$0xf]
    %v316 = vld [vmem:[%s4 + $0x34] sm:$0xf]
    %v317 = vld [vmem:[%s4 + $0x38] sm:$0xf]
    %v318 = vld [vmem:[%s4 + $0x3c] sm:$0xf]
    %v335 = vunpack.c.l.b16 %v303
    %v336 = vunpack.c.l.b16 %v304
    %v337 = vunpack.c.l.b16 %v305
    %v338 = vunpack.c.l.b16 %v306
    %v339 = vunpack.c.l.b16 %v307
    %v340 = vunpack.c.l.b16 %v308
    %v341 = vunpack.c.l.b16 %v309
    %v342 = vunpack.c.l.b16 %v310
    %v343 = vunpack.c.l.b16 %v311
    %v344 = vunpack.c.l.b16 %v312
    %v345 = vunpack.c.l.b16 %v313
    %v346 = vunpack.c.l.b16 %v314
    %v347 = vunpack.c.l.b16 %v315
    %v348 = vunpack.c.l.b16 %v316
    %v349 = vunpack.c.l.b16 %v317
    %v350 = vunpack.c.l.b16 %v318
    %v351 = vpack.c.b16 %v336, %v335
    %v352 = vpack.c.b16 %v338, %v337
    %v353 = vpack.c.b16 %v340, %v339
    %v354 = vpack.c.b16 %v342, %v341
    %v355 = vpack.c.b16 %v344, %v343
    %v356 = vpack.c.b16 %v346, %v345
    %v357 = vpack.c.b16 %v348, %v347
    %v358 = vpack.c.b16 %v350, %v349
    %367 = vmatprep.subr.bf16.mxu0 0
    %368 = vmatpush1.bf16.msra.mxu0 %v351
    %369 = vmatprep.subr.bf16.mxu0 0
    %370 = vmatpush1.bf16.msra.mxu0 %v352
    %371 = vmatprep.subr.bf16.mxu0 0
    %372 = vmatpush1.bf16.msra.mxu0 %v353
    %373 = vmatprep.subr.bf16.mxu0 0
    %374 = vmatpush1.bf16.msra.mxu0 %v354
    %375 = vmatprep.subr.bf16.mxu0 0
    %376 = vmatpush1.bf16.msra.mxu0 %v355
    %377 = vmatprep.subr.bf16.mxu0 0
    %378 = vmatpush1.bf16.msra.mxu0 %v356
    %379 = vmatprep.subr.bf16.mxu0 0
    %380 = vmatpush1.bf16.msra.mxu0 %v357
    %381 = vmatprep.subr.bf16.mxu0 0
    %382 = vmatpush1.bf16.msra.mxu0 %v358
    %383 = vmatprep.subr.bf16.mxu0 0
    %384 = vmatpush1.bf16.msra.mxu0 0
    %385 = vmatprep.subr.bf16.mxu0 0
    %386 = vmatpush1.bf16.msra.mxu0 0
    %387 = vmatprep.subr.bf16.mxu0 0
    %388 = vmatpush1.bf16.msra.mxu0 0
    %389 = vmatprep.subr.bf16.mxu0 0
    %390 = vmatpush1.bf16.msra.mxu0 0
    %391 = vmatprep.subr.bf16.mxu0 0
    %392 = vmatpush1.bf16.msra.mxu0 0
    %393 = vmatprep.subr.bf16.mxu0 0
    %394 = vmatpush1.bf16.msra.mxu0 0
    %395 = vmatprep.subr.bf16.mxu0 0
    %396 = vmatpush1.bf16.msra.mxu0 0
    %397 = vmatprep.subr.bf16.mxu0 0
    %398 = vmatpush1.bf16.msra.mxu0 0
    %399 = vmatprep.mubr.bf16.mxu0 0
    %400 = vmatmul.mubr.bf16.gmra.mrb[0].mxu0 %v302
    %v401 = vpop.f32.mrb[0].mxu0
    %v402 = vadd.f32 0.0, %v401
    %v403 = vpop.f32.mrb[0].mxu0
    %v404 = vpop.f32.mrb[0].mxu0
    %v405 = vadd.f32 0.0, %v404
    %v406 = vpop.f32.mrb[0].mxu0
    %407 = vdwg.mxu0
    %vm408 = vcmp.gt.s32.totalorder %v64, 1
    %v409 = vsel %vm408, %v64, 1
    %vm410 = vcmp.gt.s32.totalorder %v65, 1
    %v411 = vsel %vm410, %v65, 1
    %v412 = vcvt.s32.f32 %v409
    %v413 = vcvt.s32.f32 %v411
    %v414 = vrcp.pop %v412
    %v415 = vrcp.pop %v413
    %417 = vset.pattern.permute.xlu0 0
    %418 = vperm.xlu0 %417, %v414
    %v419 = vpop.permute.xlu0 %418
    %422 = vset.pattern.permute.xlu0 0
    %423 = vperm.xlu0 %422, %v415
    %v424 = vpop.permute.xlu0 %423
    %v426 = vmul.f32 %v402, %v419
    %v427 = vmul.f32 %v405, %v424
    %v428 = vpack.c.bf16 %v426, %v426
    %vm429 = vcmask 257024
    %430 = vst.msk [vmem:[#allocation2] sm:$0xf] %vm429, %v428
    %v431 = vpack.c.bf16 %v427, %v427
    %v433 = vunpack.c.l.b16 %v431
    %v434 = vpack.c.b16 %v433, %v433
    %435 = vrot.lane.b32.xlu0 %v434, 32
    %v436 = vpop.permute.xlu0 %435
    %vm438 = vcmask 519424
    %439 = vst.msk [vmem:[#allocation2] sm:$0xf] %vm438, %v436
    %v440 = vsub.f32 %v426, %v427
    %v441 = vand.u32 2147483647, %v440
    %v442 = vpack.c.bf16 %v441, %v441
    %v444 = vunpack.c.l.b16 %v442
    %v445 = vpack.c.b16 %v444, %v444
    %446 = vrot.lane.b32.xlu0 %v445, 64
    %v447 = vpop.permute.xlu0 %446
    %vm449 = vcmask 781824
    %450 = vst.msk [vmem:[#allocation2] sm:$0xf] %vm449, %v447
    %v451 = vmul.f32 %v426, %v427
    %v452 = vpack.c.bf16 %v451, %v451
    %v454 = vunpack.c.l.b16 %v452
    %v455 = vpack.c.b16 %v454, %v454
    %456 = vrot.lane.b32.xlu0 %v455, 96
    %v457 = vpop.permute.xlu0 %456
    %vm459 = vcmask 1044224
    %460 = vst.msk [vmem:[#allocation2] sm:$0xf] %vm459, %v457
    %v461 = vld [vmem:[#allocation2] sm:$0xf]
    %v462 = vld [vmem:[#allocation3] sm:$0xff]
    %v463 = vld [vmem:[#allocation3 + $0x8] sm:$0xff]
    %v464 = vld [vmem:[#allocation3 + $0x10] sm:$0xff]
    %v465 = vld [vmem:[#allocation3 + $0x18] sm:$0xff]
    %v466 = vld [vmem:[#allocation3 + $0x20] sm:$0xff]
    %v467 = vld [vmem:[#allocation3 + $0x28] sm:$0xff]
    %v468 = vld [vmem:[#allocation3 + $0x30] sm:$0xff]
    %v469 = vld [vmem:[#allocation3 + $0x38] sm:$0xff]
    %v470 = vld [vmem:[#allocation3 + $0x40] sm:$0xff]
    %v471 = vld [vmem:[#allocation3 + $0x48] sm:$0xff]
    %v472 = vld [vmem:[#allocation3 + $0x50] sm:$0xff]
    %v473 = vld [vmem:[#allocation3 + $0x58] sm:$0xff]
    %v474 = vld [vmem:[#allocation3 + $0x60] sm:$0xff]
    %v475 = vld [vmem:[#allocation3 + $0x68] sm:$0xff]
    %v476 = vld [vmem:[#allocation3 + $0x70] sm:$0xff]
    %v477 = vld [vmem:[#allocation3 + $0x78] sm:$0xff]
    %v478 = vld [vmem:[#allocation3 + $0x80] sm:$0xff]
    %v479 = vld [vmem:[#allocation3 + $0x88] sm:$0xff]
    %v480 = vld [vmem:[#allocation3 + $0x90] sm:$0xff]
    %v481 = vld [vmem:[#allocation3 + $0x98] sm:$0xff]
    %v482 = vld [vmem:[#allocation3 + $0xa0] sm:$0xff]
    %v483 = vld [vmem:[#allocation3 + $0xa8] sm:$0xff]
    %v484 = vld [vmem:[#allocation3 + $0xb0] sm:$0xff]
    %v485 = vld [vmem:[#allocation3 + $0xb8] sm:$0xff]
    %v486 = vld [vmem:[#allocation3 + $0xc0] sm:$0xff]
    %v487 = vld [vmem:[#allocation3 + $0xc8] sm:$0xff]
    %v488 = vld [vmem:[#allocation3 + $0xd0] sm:$0xff]
    %v489 = vld [vmem:[#allocation3 + $0xd8] sm:$0xff]
    %v490 = vld [vmem:[#allocation3 + $0xe0] sm:$0xff]
    %v491 = vld [vmem:[#allocation3 + $0xe8] sm:$0xff]
    %v492 = vld [vmem:[#allocation3 + $0xf0] sm:$0xff]
    %v493 = vld [vmem:[#allocation3 + $0xf8] sm:$0xff]
    %v494 = vld [vmem:[%s6] sm:$0xf]
    %v496 = vlaneseq
    %v497 = vshrl.u32 %v496, 7
    %v498 = vsub.s32 0, %v497
    %v499 = vrot.slane %v494, %v498
    %v500 = vlaneseq
    %v501 = vshrl.u32 %v500, 7
    %v502 = vsub.s32 1, %v501
    %v503 = vrot.slane %v494, %v502
    %v504 = vlaneseq
    %v505 = vshrl.u32 %v504, 7
    %v506 = vsub.s32 2, %v505
    %v507 = vrot.slane %v494, %v506
    %v508 = vlaneseq
    %v509 = vshrl.u32 %v508, 7
    %v510 = vsub.s32 3, %v509
    %v511 = vrot.slane %v494, %v510
    %v548 = vunpack.c.l.b16 %v462
    %v549 = vunpack.c.h.b16 %v462
    %v550 = vunpack.c.l.b16 %v463
    %v551 = vunpack.c.h.b16 %v463
    %v552 = vunpack.c.l.b16 %v464
    %v553 = vunpack.c.h.b16 %v464
    %v554 = vunpack.c.l.b16 %v465
    %v555 = vunpack.c.h.b16 %v465
    %v556 = vunpack.c.l.b16 %v466
    %v557 = vunpack.c.h.b16 %v466
    %v558 = vunpack.c.l.b16 %v467
    %v559 = vunpack.c.h.b16 %v467
    %v560 = vunpack.c.l.b16 %v468
    %v561 = vunpack.c.h.b16 %v468
    %v562 = vunpack.c.l.b16 %v469
    %v563 = vunpack.c.h.b16 %v469
    %v564 = vunpack.c.l.b16 %v470
    %v565 = vunpack.c.h.b16 %v470
    %v566 = vunpack.c.l.b16 %v471
    %v567 = vunpack.c.h.b16 %v471
    %v568 = vunpack.c.l.b16 %v472
    %v569 = vunpack.c.h.b16 %v472
    %v570 = vunpack.c.l.b16 %v473
    %v571 = vunpack.c.h.b16 %v473
    %v572 = vunpack.c.l.b16 %v474
    %v573 = vunpack.c.h.b16 %v474
    %v574 = vunpack.c.l.b16 %v475
    %v575 = vunpack.c.h.b16 %v475
    %v576 = vunpack.c.l.b16 %v476
    %v577 = vunpack.c.h.b16 %v476
    %v578 = vunpack.c.l.b16 %v477
    %v579 = vunpack.c.h.b16 %v477
    %v580 = vunpack.c.l.b16 %v478
    %v581 = vunpack.c.h.b16 %v478
    %v582 = vunpack.c.l.b16 %v479
    %v583 = vunpack.c.h.b16 %v479
    %v584 = vunpack.c.l.b16 %v480
    %v585 = vunpack.c.h.b16 %v480
    %v586 = vunpack.c.l.b16 %v481
    %v587 = vunpack.c.h.b16 %v481
    %v588 = vunpack.c.l.b16 %v482
    %v589 = vunpack.c.h.b16 %v482
    %v590 = vunpack.c.l.b16 %v483
    %v591 = vunpack.c.h.b16 %v483
    %v592 = vunpack.c.l.b16 %v484
    %v593 = vunpack.c.h.b16 %v484
    %v594 = vunpack.c.l.b16 %v485
    %v595 = vunpack.c.h.b16 %v485
    %v596 = vunpack.c.l.b16 %v486
    %v597 = vunpack.c.h.b16 %v486
    %v598 = vunpack.c.l.b16 %v487
    %v599 = vunpack.c.h.b16 %v487
    %v600 = vunpack.c.l.b16 %v488
    %v601 = vunpack.c.h.b16 %v488
    %v602 = vunpack.c.l.b16 %v489
    %v603 = vunpack.c.h.b16 %v489
    %v604 = vunpack.c.l.b16 %v490
    %v605 = vunpack.c.h.b16 %v490
    %v606 = vunpack.c.l.b16 %v491
    %v607 = vunpack.c.h.b16 %v491
    %v608 = vunpack.c.l.b16 %v492
    %v609 = vunpack.c.h.b16 %v492
    %v610 = vunpack.c.l.b16 %v493
    %v611 = vunpack.c.h.b16 %v493
    %v612 = vpack.c.b16 %v552, %v548
    %v613 = vpack.c.b16 %v553, %v549
    %v614 = vpack.c.b16 %v554, %v550
    %v615 = vpack.c.b16 %v555, %v551
    %v616 = vpack.c.b16 %v560, %v556
    %v617 = vpack.c.b16 %v561, %v557
    %v618 = vpack.c.b16 %v562, %v558
    %v619 = vpack.c.b16 %v563, %v559
    %v620 = vpack.c.b16 %v568, %v564
    %v621 = vpack.c.b16 %v569, %v565
    %v622 = vpack.c.b16 %v570, %v566
    %v623 = vpack.c.b16 %v571, %v567
    %v624 = vpack.c.b16 %v576, %v572
    %v625 = vpack.c.b16 %v577, %v573
    %v626 = vpack.c.b16 %v578, %v574
    %v627 = vpack.c.b16 %v579, %v575
    %v628 = vpack.c.b16 %v584, %v580
    %v629 = vpack.c.b16 %v585, %v581
    %v630 = vpack.c.b16 %v586, %v582
    %v631 = vpack.c.b16 %v587, %v583
    %v632 = vpack.c.b16 %v592, %v588
    %v633 = vpack.c.b16 %v593, %v589
    %v634 = vpack.c.b16 %v594, %v590
    %v635 = vpack.c.b16 %v595, %v591
    %v636 = vpack.c.b16 %v600, %v596
    %v637 = vpack.c.b16 %v601, %v597
    %v638 = vpack.c.b16 %v602, %v598
    %v639 = vpack.c.b16 %v603, %v599
    %v640 = vpack.c.b16 %v608, %v604
    %v641 = vpack.c.b16 %v609, %v605
    %v642 = vpack.c.b16 %v610, %v606
    %v643 = vpack.c.b16 %v611, %v607
    %676 = vmatprep.subr.bf16.mxu0 %v613
    %677 = vmatpush1.bf16.msra.mxu0 %v612
    %678 = vmatprep.subr.bf16.mxu0 %v617
    %679 = vmatpush1.bf16.msra.mxu0 %v616
    %680 = vmatprep.subr.bf16.mxu0 %v621
    %681 = vmatpush1.bf16.msra.mxu0 %v620
    %682 = vmatprep.subr.bf16.mxu0 %v625
    %683 = vmatpush1.bf16.msra.mxu0 %v624
    %684 = vmatprep.subr.bf16.mxu0 %v629
    %685 = vmatpush1.bf16.msra.mxu0 %v628
    %686 = vmatprep.subr.bf16.mxu0 %v633
    %687 = vmatpush1.bf16.msra.mxu0 %v632
    %688 = vmatprep.subr.bf16.mxu0 %v637
    %689 = vmatpush1.bf16.msra.mxu0 %v636
    %690 = vmatprep.subr.bf16.mxu0 %v641
    %691 = vmatpush1.bf16.msra.mxu0 %v640
    %692 = vmatprep.subr.bf16.mxu0 0
    %693 = vmatpush1.bf16.msra.mxu0 0
    %694 = vmatprep.subr.bf16.mxu0 0
    %695 = vmatpush1.bf16.msra.mxu0 0
    %696 = vmatprep.subr.bf16.mxu0 0
    %697 = vmatpush1.bf16.msra.mxu0 0
    %698 = vmatprep.subr.bf16.mxu0 0
    %699 = vmatpush1.bf16.msra.mxu0 0
    %700 = vmatprep.subr.bf16.mxu0 0
    %701 = vmatpush1.bf16.msra.mxu0 0
    %702 = vmatprep.subr.bf16.mxu0 0
    %703 = vmatpush1.bf16.msra.mxu0 0
    %704 = vmatprep.subr.bf16.mxu0 0
    %705 = vmatpush1.bf16.msra.mxu0 0
    %706 = vmatprep.subr.bf16.mxu0 0
    %707 = vmatpush1.bf16.msra.mxu0 0
    %708 = vmatprep.mubr.bf16.mxu0 0
    %709 = vmatmul.mubr.bf16.gmra.mrb[0].mxu0 %v461
    %v710 = vpop.f32.mrb[0].mxu0
    %v711 = vadd.f32 %v499, %v710
    %v712 = vpop.f32.mrb[0].mxu0
    %v713 = vadd.f32 %v503, %v712
    %v714 = vpop.f32.mrb[0].mxu0
    %v715 = vpop.f32.mrb[0].mxu0
    %716 = vdwg.mxu0
    %717 = vmatprep.subr.bf16.mxu0 %v615
    %718 = vmatpush1.bf16.msra.mxu0 %v614
    %719 = vmatprep.subr.bf16.mxu0 %v619
    %720 = vmatpush1.bf16.msra.mxu0 %v618
    %721 = vmatprep.subr.bf16.mxu0 %v623
    %722 = vmatpush1.bf16.msra.mxu0 %v622
    %723 = vmatprep.subr.bf16.mxu0 %v627
    %724 = vmatpush1.bf16.msra.mxu0 %v626
    %725 = vmatprep.subr.bf16.mxu0 %v631
    %726 = vmatpush1.bf16.msra.mxu0 %v630
    %727 = vmatprep.subr.bf16.mxu0 %v635
    %728 = vmatpush1.bf16.msra.mxu0 %v634
    %729 = vmatprep.subr.bf16.mxu0 %v639
    %730 = vmatpush1.bf16.msra.mxu0 %v638
    %731 = vmatprep.subr.bf16.mxu0 %v643
    %732 = vmatpush1.bf16.msra.mxu0 %v642
    %733 = vmatprep.subr.bf16.mxu0 0
    %734 = vmatpush1.bf16.msra.mxu0 0
    %735 = vmatprep.subr.bf16.mxu0 0
    %736 = vmatpush1.bf16.msra.mxu0 0
    %737 = vmatprep.subr.bf16.mxu0 0
    %738 = vmatpush1.bf16.msra.mxu0 0
    %739 = vmatprep.subr.bf16.mxu0 0
    %740 = vmatpush1.bf16.msra.mxu0 0
    %741 = vmatprep.subr.bf16.mxu0 0
    %742 = vmatpush1.bf16.msra.mxu0 0
    %743 = vmatprep.subr.bf16.mxu0 0
    %744 = vmatpush1.bf16.msra.mxu0 0
    %745 = vmatprep.subr.bf16.mxu0 0
    %746 = vmatpush1.bf16.msra.mxu0 0
    %747 = vmatprep.subr.bf16.mxu0 0
    %748 = vmatpush1.bf16.msra.mxu0 0
    %749 = vmatprep.mubr.bf16.mxu0 0
    %750 = vmatmul.mubr.bf16.gmra.mrb[0].mxu0 %v461
    %v751 = vpop.f32.mrb[0].mxu0
    %v752 = vadd.f32 %v507, %v751
    %v753 = vpop.f32.mrb[0].mxu0
    %v754 = vadd.f32 %v511, %v753
    %v755 = vpop.f32.mrb[0].mxu0
    %v756 = vpop.f32.mrb[0].mxu0
    %757 = vdwg.mxu0
    %v758 = vtanh.pop %v711
    %v759 = vtanh.pop %v713
    %v760 = vtanh.pop %v752
    %v761 = vtanh.pop %v754
    %v762 = vpack.c.bf16 %v758, %v758
    %v763 = vpack.c.bf16 %v759, %v759
    %v764 = vpack.c.bf16 %v760, %v760
    %v765 = vpack.c.bf16 %v761, %v761
    %v766 = vld [vmem:[#allocation6] sm:$0xf]
    %v767 = vld [vmem:[#allocation6 + $0x4] sm:$0xf]
    %v768 = vld [vmem:[#allocation6 + $0x8] sm:$0xf]
    %v769 = vld [vmem:[#allocation6 + $0xc] sm:$0xf]
    %v770 = vld [vmem:[#allocation6 + $0x10] sm:$0xf]
    %v771 = vld [vmem:[#allocation6 + $0x14] sm:$0xf]
    %v772 = vld [vmem:[#allocation6 + $0x18] sm:$0xf]
    %v773 = vld [vmem:[#allocation6 + $0x1c] sm:$0xf]
    %v774 = vld [vmem:[#allocation6 + $0x20] sm:$0xf]
    %v775 = vld [vmem:[#allocation6 + $0x24] sm:$0xf]
    %v776 = vld [vmem:[#allocation6 + $0x28] sm:$0xf]
    %v777 = vld [vmem:[#allocation6 + $0x2c] sm:$0xf]
    %v778 = vld [vmem:[#allocation6 + $0x30] sm:$0xf]
    %v779 = vld [vmem:[#allocation6 + $0x34] sm:$0xf]
    %v780 = vld [vmem:[#allocation6 + $0x38] sm:$0xf]
    %v781 = vld [vmem:[#allocation6 + $0x3c] sm:$0xf]
    %v782 = vld [vmem:[#allocation6 + $0x40] sm:$0xf]
    %v783 = vld [vmem:[#allocation6 + $0x44] sm:$0xf]
    %v784 = vld [vmem:[#allocation6 + $0x48] sm:$0xf]
    %v785 = vld [vmem:[#allocation6 + $0x4c] sm:$0xf]
    %v786 = vld [vmem:[#allocation6 + $0x50] sm:$0xf]
    %v787 = vld [vmem:[#allocation6 + $0x54] sm:$0xf]
    %v788 = vld [vmem:[#allocation6 + $0x58] sm:$0xf]
    %v789 = vld [vmem:[#allocation6 + $0x5c] sm:$0xf]
    %v790 = vld [vmem:[#allocation6 + $0x60] sm:$0xf]
    %v791 = vld [vmem:[#allocation6 + $0x64] sm:$0xf]
    %v792 = vld [vmem:[#allocation6 + $0x68] sm:$0xf]
    %v793 = vld [vmem:[#allocation6 + $0x6c] sm:$0xf]
    %v794 = vld [vmem:[#allocation6 + $0x70] sm:$0xf]
    %v795 = vld [vmem:[#allocation6 + $0x74] sm:$0xf]
    %v796 = vld [vmem:[#allocation6 + $0x78] sm:$0xf]
    %v797 = vld [vmem:[#allocation6 + $0x7c] sm:$0xf]
    %v798 = vld [vmem:[#allocation6 + $0x80] sm:$0xf]
    %v799 = vld [vmem:[#allocation6 + $0x84] sm:$0xf]
    %v800 = vld [vmem:[#allocation6 + $0x88] sm:$0xf]
    %v801 = vld [vmem:[#allocation6 + $0x8c] sm:$0xf]
    %v802 = vld [vmem:[#allocation6 + $0x90] sm:$0xf]
    %v803 = vld [vmem:[#allocation6 + $0x94] sm:$0xf]
    %v804 = vld [vmem:[#allocation6 + $0x98] sm:$0xf]
    %v805 = vld [vmem:[#allocation6 + $0x9c] sm:$0xf]
    %v806 = vld [vmem:[#allocation6 + $0xa0] sm:$0xf]
    %v807 = vld [vmem:[#allocation6 + $0xa4] sm:$0xf]
    %v808 = vld [vmem:[#allocation6 + $0xa8] sm:$0xf]
    %v809 = vld [vmem:[#allocation6 + $0xac] sm:$0xf]
    %v810 = vld [vmem:[#allocation6 + $0xb0] sm:$0xf]
    %v811 = vld [vmem:[#allocation6 + $0xb4] sm:$0xf]
    %v812 = vld [vmem:[#allocation6 + $0xb8] sm:$0xf]
    %v813 = vld [vmem:[#allocation6 + $0xbc] sm:$0xf]
    %v814 = vld [vmem:[#allocation6 + $0xc0] sm:$0xf]
    %v815 = vld [vmem:[#allocation6 + $0xc4] sm:$0xf]
    %v816 = vld [vmem:[#allocation6 + $0xc8] sm:$0xf]
    %v817 = vld [vmem:[#allocation6 + $0xcc] sm:$0xf]
    %v818 = vld [vmem:[#allocation6 + $0xd0] sm:$0xf]
    %v819 = vld [vmem:[#allocation6 + $0xd4] sm:$0xf]
    %v820 = vld [vmem:[#allocation6 + $0xd8] sm:$0xf]
    %v821 = vld [vmem:[#allocation6 + $0xdc] sm:$0xf]
    %v822 = vld [vmem:[#allocation6 + $0xe0] sm:$0xf]
    %v823 = vld [vmem:[#allocation6 + $0xe4] sm:$0xf]
    %v824 = vld [vmem:[#allocation6 + $0xe8] sm:$0xf]
    %v825 = vld [vmem:[#allocation6 + $0xec] sm:$0xf]
    %v826 = vld [vmem:[#allocation6 + $0xf0] sm:$0xf]
    %v827 = vld [vmem:[#allocation6 + $0xf4] sm:$0xf]
    %v828 = vld [vmem:[#allocation6 + $0xf8] sm:$0xf]
    %v829 = vld [vmem:[#allocation6 + $0xfc] sm:$0xf]
    %v830 = vld [vmem:[%s8] sm:$0x1]
    %v832 = vlaneseq
    %v833 = vshrl.u32 %v832, 7
    %v834 = vsub.s32 0, %v833
    %v835 = vrot.slane %v830, %v834
    %v901 = vunpack.c.l.b16 %v766
    %v902 = vunpack.c.l.b16 %v767
    %v903 = vunpack.c.l.b16 %v768
    %v904 = vunpack.c.l.b16 %v769
    %v905 = vunpack.c.l.b16 %v770
    %v906 = vunpack.c.l.b16 %v771
    %v907 = vunpack.c.l.b16 %v772
    %v908 = vunpack.c.l.b16 %v773
    %v909 = vunpack.c.l.b16 %v774
    %v910 = vunpack.c.l.b16 %v775
    %v911 = vunpack.c.l.b16 %v776
    %v912 = vunpack.c.l.b16 %v777
    %v913 = vunpack.c.l.b16 %v778
    %v914 = vunpack.c.l.b16 %v779
    %v915 = vunpack.c.l.b16 %v780
    %v916 = vunpack.c.l.b16 %v781
    %v917 = vunpack.c.l.b16 %v782
    %v918 = vunpack.c.l.b16 %v783
    %v919 = vunpack.c.l.b16 %v784
    %v920 = vunpack.c.l.b16 %v785
    %v921 = vunpack.c.l.b16 %v786
    %v922 = vunpack.c.l.b16 %v787
    %v923 = vunpack.c.l.b16 %v788
    %v924 = vunpack.c.l.b16 %v789
    %v925 = vunpack.c.l.b16 %v790
    %v926 = vunpack.c.l.b16 %v791
    %v927 = vunpack.c.l.b16 %v792
    %v928 = vunpack.c.l.b16 %v793
    %v929 = vunpack.c.l.b16 %v794
    %v930 = vunpack.c.l.b16 %v795
    %v931 = vunpack.c.l.b16 %v796
    %v932 = vunpack.c.l.b16 %v797
    %v933 = vunpack.c.l.b16 %v798
    %v934 = vunpack.c.l.b16 %v799
    %v935 = vunpack.c.l.b16 %v800
    %v936 = vunpack.c.l.b16 %v801
    %v937 = vunpack.c.l.b16 %v802
    %v938 = vunpack.c.l.b16 %v803
    %v939 = vunpack.c.l.b16 %v804
    %v940 = vunpack.c.l.b16 %v805
    %v941 = vunpack.c.l.b16 %v806
    %v942 = vunpack.c.l.b16 %v807
    %v943 = vunpack.c.l.b16 %v808
    %v944 = vunpack.c.l.b16 %v809
    %v945 = vunpack.c.l.b16 %v810
    %v946 = vunpack.c.l.b16 %v811
    %v947 = vunpack.c.l.b16 %v812
    %v948 = vunpack.c.l.b16 %v813
    %v949 = vunpack.c.l.b16 %v814
    %v950 = vunpack.c.l.b16 %v815
    %v951 = vunpack.c.l.b16 %v816
    %v952 = vunpack.c.l.b16 %v817
    %v953 = vunpack.c.l.b16 %v818
    %v954 = vunpack.c.l.b16 %v819
    %v955 = vunpack.c.l.b16 %v820
    %v956 = vunpack.c.l.b16 %v821
    %v957 = vunpack.c.l.b16 %v822
    %v958 = vunpack.c.l.b16 %v823
    %v959 = vunpack.c.l.b16 %v824
    %v960 = vunpack.c.l.b16 %v825
    %v961 = vunpack.c.l.b16 %v826
    %v962 = vunpack.c.l.b16 %v827
    %v963 = vunpack.c.l.b16 %v828
    %v964 = vunpack.c.l.b16 %v829
    %v965 = vpack.c.b16 %v902, %v901
    %v966 = vpack.c.b16 %v904, %v903
    %v967 = vpack.c.b16 %v906, %v905
    %v968 = vpack.c.b16 %v908, %v907
    %v969 = vpack.c.b16 %v910, %v909
    %v970 = vpack.c.b16 %v912, %v911
    %v971 = vpack.c.b16 %v914, %v913
    %v972 = vpack.c.b16 %v916, %v915
    %v973 = vpack.c.b16 %v918, %v917
    %v974 = vpack.c.b16 %v920, %v919
    %v975 = vpack.c.b16 %v922, %v921
    %v976 = vpack.c.b16 %v924, %v923
    %v977 = vpack.c.b16 %v926, %v925
    %v978 = vpack.c.b16 %v928, %v927
    %v979 = vpack.c.b16 %v930, %v929
    %v980 = vpack.c.b16 %v932, %v931
    %v981 = vpack.c.b16 %v934, %v933
    %v982 = vpack.c.b16 %v936, %v935
    %v983 = vpack.c.b16 %v938, %v937
    %v984 = vpack.c.b16 %v940, %v939
    %v985 = vpack.c.b16 %v942, %v941
    %v986 = vpack.c.b16 %v944, %v943
    %v987 = vpack.c.b16 %v946, %v945
    %v988 = vpack.c.b16 %v948, %v947
    %v989 = vpack.c.b16 %v950, %v949
    %v990 = vpack.c.b16 %v952, %v951
    %v991 = vpack.c.b16 %v954, %v953
    %v992 = vpack.c.b16 %v956, %v955
    %v993 = vpack.c.b16 %v958, %v957
    %v994 = vpack.c.b16 %v960, %v959
    %v995 = vpack.c.b16 %v962, %v961
    %v996 = vpack.c.b16 %v964, %v963
    %1029 = vmatprep.subr.bf16.mxu0 0
    %1030 = vmatpush1.bf16.msra.mxu0 %v965
    %1031 = vmatprep.subr.bf16.mxu0 0
    %1032 = vmatpush1.bf16.msra.mxu0 %v966
    %1033 = vmatprep.subr.bf16.mxu0 0
    %1034 = vmatpush1.bf16.msra.mxu0 %v967
    %1035 = vmatprep.subr.bf16.mxu0 0
    %1036 = vmatpush1.bf16.msra.mxu0 %v968
    %1037 = vmatprep.subr.bf16.mxu0 0
    %1038 = vmatpush1.bf16.msra.mxu0 %v969
    %1039 = vmatprep.subr.bf16.mxu0 0
    %1040 = vmatpush1.bf16.msra.mxu0 %v970
    %1041 = vmatprep.subr.bf16.mxu0 0
    %1042 = vmatpush1.bf16.msra.mxu0 %v971
    %1043 = vmatprep.subr.bf16.mxu0 0
    %1044 = vmatpush1.bf16.msra.mxu0 %v972
    %1045 = vmatprep.subr.bf16.mxu0 0
    %1046 = vmatpush1.bf16.msra.mxu0 %v973
    %1047 = vmatprep.subr.bf16.mxu0 0
    %1048 = vmatpush1.bf16.msra.mxu0 %v974
    %1049 = vmatprep.subr.bf16.mxu0 0
    %1050 = vmatpush1.bf16.msra.mxu0 %v975
    %1051 = vmatprep.subr.bf16.mxu0 0
    %1052 = vmatpush1.bf16.msra.mxu0 %v976
    %1053 = vmatprep.subr.bf16.mxu0 0
    %1054 = vmatpush1.bf16.msra.mxu0 %v977
    %1055 = vmatprep.subr.bf16.mxu0 0
    %1056 = vmatpush1.bf16.msra.mxu0 %v978
    %1057 = vmatprep.subr.bf16.mxu0 0
    %1058 = vmatpush1.bf16.msra.mxu0 %v979
    %1059 = vmatprep.subr.bf16.mxu0 0
    %1060 = vmatpush1.bf16.msra.mxu0 %v980
    %1061 = vmatprep.mubr.bf16.mxu0 %v763
    %1062 = vmatmul.mubr.bf16.gmra.mrb[0].mxu0 %v762
    %v1063 = vpop.f32.mrb[0].mxu0
    %v1064 = vadd.f32 %v835, %v1063
    %v1065 = vpop.f32.mrb[0].mxu0
    %v1066 = vpop.f32.mrb[0].mxu0
    %v1067 = vpop.f32.mrb[0].mxu0
    %1068 = vdwg.mxu0
    %1069 = vmatprep.subr.bf16.mxu0 0
    %1070 = vmatpush1.bf16.msra.mxu0 %v981
    %1071 = vmatprep.subr.bf16.mxu0 0
    %1072 = vmatpush1.bf16.msra.mxu0 %v982
    %1073 = vmatprep.subr.bf16.mxu0 0
    %1074 = vmatpush1.bf16.msra.mxu0 %v983
    %1075 = vmatprep.subr.bf16.mxu0 0
    %1076 = vmatpush1.bf16.msra.mxu0 %v984
    %1077 = vmatprep.subr.bf16.mxu0 0
    %1078 = vmatpush1.bf16.msra.mxu0 %v985
    %1079 = vmatprep.subr.bf16.mxu0 0
    %1080 = vmatpush1.bf16.msra.mxu0 %v986
    %1081 = vmatprep.subr.bf16.mxu0 0
    %1082 = vmatpush1.bf16.msra.mxu0 %v987
    %1083 = vmatprep.subr.bf16.mxu0 0
    %1084 = vmatpush1.bf16.msra.mxu0 %v988
    %1085 = vmatprep.subr.bf16.mxu0 0
    %1086 = vmatpush1.bf16.msra.mxu0 %v989
    %1087 = vmatprep.subr.bf16.mxu0 0
    %1088 = vmatpush1.bf16.msra.mxu0 %v990
    %1089 = vmatprep.subr.bf16.mxu0 0
    %1090 = vmatpush1.bf16.msra.mxu0 %v991
    %1091 = vmatprep.subr.bf16.mxu0 0
    %1092 = vmatpush1.bf16.msra.mxu0 %v992
    %1093 = vmatprep.subr.bf16.mxu0 0
    %1094 = vmatpush1.bf16.msra.mxu0 %v993
    %1095 = vmatprep.subr.bf16.mxu0 0
    %1096 = vmatpush1.bf16.msra.mxu0 %v994
    %1097 = vmatprep.subr.bf16.mxu0 0
    %1098 = vmatpush1.bf16.msra.mxu0 %v995
    %1099 = vmatprep.subr.bf16.mxu0 0
    %1100 = vmatpush1.bf16.msra.mxu0 %v996
    %1101 = vmatprep.mubr.bf16.mxu0 %v765
    %1102 = vmatmul.mubr.bf16.gmra.mrb[0].mxu0 %v764
    %v1103 = vpop.f32.mrb[0].mxu0
    %v1104 = vadd.f32 %v1064, %v1103
    %v1105 = vpop.f32.mrb[0].mxu0
    %v1106 = vpop.f32.mrb[0].mxu0
    %v1107 = vpop.f32.mrb[0].mxu0
    %1108 = vdwg.mxu0
    %1109 = vst [vmem:[#allocation8] sm:$0xff] %v1104
    // Predicated region
    $region46: #{tpu_custom_call.1} parent=1 // pred_check
      _
    $region47: #{tpu_custom_call.1} parent=1 // pred_check_branch
      %1111 = sbr.rel (0) target = $region49
    $region48: #{tpu_custom_call.1} parent=1 // pred_region
      %s1113 = ssub.s32 128, 128
      %1114 = vsyncadd [#allocation5], %s1113
      %s1116 = sshll.u32 [#allocation8], 4
      %s1117 = int_to_ptr.vmem [resolvable:$true] %s1116
      %1119 = dma.vmem_to_hbm [thread:$0]  %s1117, 128, %s9, [#allocation5]
    $region49: #{tpu_custom_call.1} parent=1 // pred_fallthru
      _
    // Predicated region
    $region50: #{tpu_custom_call.1} parent=1 // pred_check
      _
    $region51: #{tpu_custom_call.1} parent=1 // pred_check_branch
      %1121 = sbr.rel (0) target = $region53
    $region52: #{tpu_custom_call.1} parent=1 // pred_region
      %1122 = dma.done [#allocation5], 128
    $region53: #{tpu_custom_call.1} parent=1 // pred_fallthru
      _
    %1123 = vsyncpa [#allocation4], 1
    %1124 = vsyncpa [#allocation7], 1
    %1125 = vsyncpa [#allocation5], 1

</llo_original>
